<compile_context>
chip_gen: v7x
topology: tpu7x:2x2x1
jax: 0.10.0
libtpu: 0.0.40
codegen_flags: <defaults>
</compile_context>

<pallas_src>
import functools

import jax
import jax.numpy as jnp
from jax import lax
from jax.experimental import pallas as pl
from jax.experimental.pallas import tpu as pltpu

_INV_SQRT2 = 0.7071067811865476
_LANE = 128
_SUBLANE = 8


def _round_up(x, m):
    return (x + m - 1) // m * m


def _gelu_exact(y):
    # nn.GELU() default is approximate='none' -> exact erf formulation.
    return 0.5 * y * (1.0 + lax.erf(y * _INV_SQRT2))


# --------------------------------------------------------------------------
# Pass 1: conv-as-matmul + per-tile BN partial statistics (bn_act=True path)
# --------------------------------------------------------------------------
def _conv_stats_kernel(p_ref, w_ref, y_ref, stats_ref, *, tn, slice_w):
    # Weight is resident in VMEM (constant block index); slice the N tile
    # in-kernel only when the grid actually has an N axis.
    if slice_w:
        j = pl.program_id(1)
        w = w_ref[:, pl.ds(pl.multiple_of(j * tn, _LANE), tn)]
    else:
        w = w_ref[...]
    # (TM, Kp) @ (Kp, TN): bf16 (or f32) operands, f32 accumulation on the MXU.
    acc = jnp.dot(p_ref[...], w, preferred_element_type=jnp.float32)
    y_ref[...] = acc.astype(y_ref.dtype)

    # Per-tile per-channel sum (row 0) and sum-of-squares (row 1) from the f32
    # accumulator.  Column reduction rides the XLU (it has slack here); rows
    # 2..7 are zero padding to satisfy the 8-sublane output tile.
    s1 = jnp.sum(acc, axis=0, keepdims=True)
    s2 = jnp.sum(acc * acc, axis=0, keepdims=True)
    stats_ref[...] = jnp.concatenate(
        [s1, s2, jnp.zeros((_SUBLANE - 2, tn), jnp.float32)], axis=0)


# --------------------------------------------------------------------------
# Pass 2: BatchNorm affine (precomputed scale/shift) + exact GELU
# --------------------------------------------------------------------------
def _bn_gelu_kernel(y_ref, scale_ref, shift_ref, o_ref):
    y = y_ref[...].astype(jnp.float32) * scale_ref[...] + shift_ref[...]
    o_ref[...] = _gelu_exact(y)


# --------------------------------------------------------------------------
# bn_act=False path: conv (with bias) only
# --------------------------------------------------------------------------
def _conv_bias_kernel(p_ref, w_ref, b_ref, o_ref, *, tn, slice_w):
    if slice_w:
        j = pl.program_id(1)
        w = w_ref[:, pl.ds(pl.multiple_of(j * tn, _LANE), tn)]
        b = b_ref[:, pl.ds(pl.multiple_of(j * tn, _LANE), tn)]
    else:
        w = w_ref[...]
        b = b_ref[...]
    acc = jnp.dot(p_ref[...], w, preferred_element_type=jnp.float32)
    o_ref[...] = (acc + b).astype(o_ref.dtype)


# --------------------------------------------------------------------------
# Wrapper-side glue: im2col (pure data movement) and layout handling
# --------------------------------------------------------------------------
def _im2col(x_nchw, kh, kw, stride, padding):
    n, cin, h, w = x_nchw.shape
    ho = (h + 2 * padding - kh) // stride + 1
    wo = (w + 2 * padding - kw) // stride + 1
    x_nhwc = jnp.transpose(x_nchw, (0, 2, 3, 1))
    xpad = jnp.pad(x_nhwc, ((0, 0), (padding, padding), (padding, padding), (0, 0)))
    cols = []
    for ky in range(kh):
        for kx in range(kw):
            cols.append(
                xpad[:, ky:ky + ho * stride:stride, kx:kx + wo * stride:stride, :])
    patches = jnp.concatenate(cols, axis=-1)            # (N, Ho, Wo, KH*KW*Cin)
    return patches.reshape(n * ho * wo, kh * kw * cin), ho, wo


def cnn_block_forward(x_nchw, conv_w, conv_b, bn_gamma, bn_beta, *,
                      bn_act=True, stride=1, padding=1, eps=1e-5,
                      tile_m=512, mxu_dtype=jnp.bfloat16,
                      intermediate_dtype=None, out_format="NCHW"):
    """Pallas implementation of CNNBlock.forward.

    tile_m: rows of the im2col matmul per grid step (multiple of 8).  Keep it
            >= 512 on all generations (v5e/v6e/v7x) — tiles here are far below
            even v7x's 64 MiB VMEM; for v7x megacore sharding prefer shapes
            where M/tile_m >= 2 so the "parallel" M axis splits across both TCs.
    mxu_dtype: matmul operand dtype (bf16 default; accumulation is always f32).
    intermediate_dtype: dtype of the pass1->pass2 conv-output intermediate
            (defaults to mxu_dtype; BN statistics are always f32-accurate).
    out_format: "NCHW" (PyTorch semantics, default) or "NHWC" (skips the
            trailing full-tensor transpose).
    """
    n, cin, _, _ = x_nchw.shape
    cout, _, kh, kw = conv_w.shape
    inter_dtype = mxu_dtype if intermediate_dtype is None else intermediate_dtype

    # Cast BEFORE im2col so the staged patch copy is already in the MXU dtype.
    patches, ho, wo = _im2col(x_nchw.astype(mxu_dtype), kh, kw, stride, padding)
    m = n * ho * wo
    kd = kh * kw * cin

    # Lane/tile-aligned padded sizes.
    kp = _round_up(kd, _LANE)                    # contraction dim, lane-dense LHS
    cp = _round_up(cout, _LANE)                  # output channels, lane-dense store

    itemsize = jnp.dtype(mxu_dtype).itemsize
    y_itemsize = jnp.dtype(inter_dtype).itemsize

    tm = max(_SUBLANE, _round_up(min(tile_m, _round_up(m, _SUBLANE)), _SUBLANE))
    # Only shrink the M tile if the (tm, Kp) LHS tile itself gets large.
    while tm > _SUBLANE and tm * kp * itemsize > (8 << 20):
        tm //= 2
    tm = max(_SUBLANE, _round_up(tm, _SUBLANE))
    mp = _round_up(m, tm)
    gm = mp // tm

    # N tile: full padded Cout when possible (widest lane-dense stores, best
    # MXU N-utilization on the 256-wide v6e/v7x MXUs), else widest divisor.
    if cp <= 512:
        tn = cp
    elif cp % 512 == 0:
        tn = 512
    elif cp % 256 == 0:
        tn = 256
    else:
        tn = _LANE
    gn = cp // tn

    # Weight residency: keep the whole (Kp, Cp) weight in VMEM (fetched once,
    # constant block index) unless it is too large, then stream (Kp, tn) blocks.
    w_bytes = kp * cp * itemsize
    resident_w = (2 * w_bytes) <= (16 << 20)
    slice_w = resident_w and gn > 1

    # Zero padding: padded rows/cols contribute exactly 0 to the matmul and sums.
    patches = jnp.pad(patches, ((0, mp - m), (0, kp - kd)))
    # (Cout, Cin, KH, KW) -> (KH, KW, Cin, Cout) -> (KH*KW*Cin, Cout): matches im2col cols.
    w2d = jnp.transpose(conv_w, (2, 3, 1, 0)).reshape(kd, cout)
    w2d = jnp.pad(w2d, ((0, kp - kd), (0, cp - cout))).astype(mxu_dtype)

    p_spec = pl.BlockSpec((tm, kp), lambda i, j: (i, 0))
    if resident_w:
        w_spec = pl.BlockSpec((kp, cp), lambda i, j: (0, 0))   # fetched once
        w_tile_bytes = w_bytes
    else:
        w_spec = pl.BlockSpec((kp, tn), lambda i, j: (0, j))
        w_tile_bytes = kp * tn * itemsize
    y_spec = pl.BlockSpec((tm, tn), lambda i, j: (i, j))

    def _cparams(tile_bytes, semantics):
        limit = int(min(48 << 20, max(8 << 20, int(tile_bytes))))
        return pltpu.CompilerParams(dimension_semantics=semantics,
                                    vmem_limit_bytes=limit)

    # Per-pass VMEM budgets (double-buffered blocks + f32 compute temps + slack).
    pass1_bytes = (2 * tm * kp * itemsize + 2 * w_tile_bytes
                   + 2 * tm * tn * y_itemsize + 2 * _SUBLANE * tn * 4
                   + 3 * tm * tn * 4) * 1.25
    cparams1 = _cparams(pass1_bytes, ("parallel", "parallel"))

    if bn_act:
        # ---- Pass 1: tiled matmul + per-tile partial BN statistics ----------
        conv_cost = pl.CostEstimate(
            flops=int(2 * mp * kp * cp + 3 * mp * cp), transcendentals=0,
            bytes_accessed=int(mp * kp * itemsize + kp * cp * itemsize
                               + mp * cp * y_itemsize + gm * _SUBLANE * cp * 4))
        kern1 = functools.partial(_conv_stats_kernel, tn=tn, slice_w=slice_w)
        conv_out, stats = pl.pallas_call(
            kern1,
            out_shape=(jax.ShapeDtypeStruct((mp, cp), inter_dtype),
                       jax.ShapeDtypeStruct((gm * _SUBLANE, cp), jnp.float32)),
            grid_spec=pltpu.PrefetchScalarGridSpec(
                num_scalar_prefetch=0, grid=(gm, gn),
                in_specs=[p_spec, w_spec],
                out_specs=(y_spec,
                           pl.BlockSpec((_SUBLANE, tn), lambda i, j: (i, j)))),
            compiler_params=cparams1,
            cost_estimate=conv_cost,
        )(patches, w2d)

        # ---- Tiny cross-tile reduction + BN affine folding (O(Cout) glue) ----
        stats = stats.reshape(gm, _SUBLANE, cp)
        total = jnp.sum(stats[:, 0, :], axis=0)
        total_sq = jnp.sum(stats[:, 1, :], axis=0)
        inv_m = 1.0 / float(m)                       # true M: padded rows add 0
        mean = total * inv_m
        # TODO(synk): E[x^2]-E[x]^2 in f32 cancels if |mean| >> std; switch to shifted/Welford per-tile sums if conv outputs can have large means.
        var = jnp.maximum(total_sq * inv_m - mean * mean, 0.0)  # biased batch var
        gamma_p = jnp.pad(bn_gamma.astype(jnp.float32), (0, cp - cout))
        beta_p = jnp.pad(bn_beta.astype(jnp.float32), (0, cp - cout))
        scale = gamma_p * lax.rsqrt(var + eps)
        shift = beta_p - mean * scale

        # ---- Pass 2: normalize + exact GELU (1-D grid, full-Cp wide slabs) ---
        pass2_bytes = (2 * tm * cp * (y_itemsize + 4) + 4 * cp * 4
                       + tm * cp * 4) * 1.25
        cparams2 = _cparams(pass2_bytes, ("parallel",))
        bn_cost = pl.CostEstimate(
            flops=int(6 * mp * cp), transcendentals=int(mp * cp),
            bytes_accessed=int(mp * cp * (y_itemsize + 4)))
        out2d = pl.pallas_call(
            _bn_gelu_kernel,
            out_shape=jax.ShapeDtypeStruct((mp, cp), jnp.float32),
            grid_spec=pltpu.PrefetchScalarGridSpec(
                num_scalar_prefetch=0, grid=(gm,),
                in_specs=[pl.BlockSpec((tm, cp), lambda i: (i, 0)),
                          pl.BlockSpec((1, cp), lambda i: (0, 0)),
                          pl.BlockSpec((1, cp), lambda i: (0, 0))],
                out_specs=pl.BlockSpec((tm, cp), lambda i: (i, 0))),
            compiler_params=cparams2,
            cost_estimate=bn_cost,
        )(conv_out, scale.reshape(1, cp), shift.reshape(1, cp))
    else:
        bias_p = jnp.pad(conv_b.astype(jnp.float32), (0, cp - cout)).reshape(1, cp)
        b_spec = (pl.BlockSpec((1, cp), lambda i, j: (0, 0)) if resident_w
                  else pl.BlockSpec((1, tn), lambda i, j: (0, j)))
        pass1b_bytes = (2 * tm * kp * itemsize + 2 * w_tile_bytes
                        + 2 * tm * tn * 4 + 4 * cp * 4 + tm * tn * 4) * 1.25
        cparams1b = _cparams(pass1b_bytes, ("parallel", "parallel"))
        conv_cost = pl.CostEstimate(
            flops=int(2 * mp * kp * cp + mp * cp), transcendentals=0,
            bytes_accessed=int(mp * kp * itemsize + kp * cp * itemsize
                               + mp * cp * 4))
        kern = functools.partial(_conv_bias_kernel, tn=tn, slice_w=slice_w)
        out2d = pl.pallas_call(
            kern,
            out_shape=jax.ShapeDtypeStruct((mp, cp), jnp.float32),
            grid_spec=pltpu.PrefetchScalarGridSpec(
                num_scalar_prefetch=0, grid=(gm, gn),
                in_specs=[p_spec, w_spec, b_spec],
                out_specs=y_spec),
            compiler_params=cparams1b,
            cost_estimate=conv_cost,
        )(patches, w2d, bias_p)

    out_nhwc = out2d[:m, :cout].reshape(n, ho, wo, cout)
    if out_format == "NHWC":
        return out_nhwc                       # skip the extra HBM round trip
    # Module semantics are NCHW (PyTorch default).
    return jnp.transpose(out_nhwc, (0, 3, 1, 2))


# --------------------------------------------------------------------------
# Pure-JAX reference matching the PyTorch forward (f32)
# --------------------------------------------------------------------------
def _reference(x, conv_w, conv_b, gamma, beta, *, bn_act, stride, padding, eps=1e-5):
    y = lax.conv_general_dilated(
        x, conv_w, window_strides=(stride, stride),
        padding=((padding, padding), (padding, padding)),
        dimension_numbers=("NCHW", "OIHW", "NCHW"))
    if not bn_act:
        return y + conv_b.reshape(1, -1, 1, 1)
    mean = y.mean(axis=(0, 2, 3), keepdims=True)
    var = jnp.square(y - mean).mean(axis=(0, 2, 3), keepdims=True)
    yn = (y - mean) / jnp.sqrt(var + eps)
    yn = yn * gamma.reshape(1, -1, 1, 1) + beta.reshape(1, -1, 1, 1)
    return jax.nn.gelu(yn, approximate=False)


if __name__ == "__main__":
    # batch=2, in_channels=4, out_channels=8, spatial=16, kernel=3, stride=1, pad=1.
    N, CIN, COUT, H, W, K = 2, 4, 8, 16, 16, 3

    key = jax.random.PRNGKey(0)
    kx, kw_, kb, kg, kbe = jax.random.split(key, 5)
    x = jax.random.normal(kx, (N, CIN, H, W), dtype=jnp.float32)
    conv_w = 0.1 * jax.random.normal(kw_, (COUT, CIN, K, K), dtype=jnp.float32)
    conv_b = 0.1 * jax.random.normal(kb, (COUT,), dtype=jnp.float32)  # bn_act=False only
    bn_gamma = 1.0 + 0.1 * jax.random.normal(kg, (COUT,), dtype=jnp.float32)
    bn_beta = 0.1 * jax.random.normal(kbe, (COUT,), dtype=jnp.float32)

    ref_bn = _reference(x, conv_w, conv_b, bn_gamma, bn_beta,
                        bn_act=True, stride=1, padding=1)
    ref_conv = _reference(x, conv_w, conv_b, bn_gamma, bn_beta,
                          bn_act=False, stride=1, padding=1)

    # 1) Performance-default path: bf16 MXU operands + bf16 conv intermediate,
    #    f32 accumulate/stats.  tile_m=128 so the M grid has 4 steps and the
    #    cross-tile BN reduction path is exercised.
    out = jax.block_until_ready(cnn_block_forward(
        x, conv_w, conv_b, bn_gamma, bn_beta,
        bn_act=True, stride=1, padding=1, tile_m=128))
    assert out.shape == (N, COUT, H, W)
    # bf16 operand + bf16 intermediate quantization bound (outputs are O(1)).
    assert float(jnp.max(jnp.abs(out - ref_bn))) < 1e-1

    # 2) f32 operands + f32 intermediate: the tiled two-pass logic is exact.
    out32 = jax.block_until_ready(cnn_block_forward(
        x, conv_w, conv_b, bn_gamma, bn_beta,
        bn_act=True, stride=1, padding=1, tile_m=128, mxu_dtype=jnp.float32))
    assert float(jnp.max(jnp.abs(out32 - ref_bn))) < 1e-4

    # 3) bn_act=False path (conv with bias only), f32 and bf16.
    outc32 = jax.block_until_ready(cnn_block_forward(
        x, conv_w, conv_b, bn_gamma, bn_beta,
        bn_act=False, stride=1, padding=1, tile_m=128, mxu_dtype=jnp.float32))
    assert float(jnp.max(jnp.abs(outc32 - ref_conv))) < 1e-4

    outc16 = jax.block_until_ready(cnn_block_forward(
        x, conv_w, conv_b, bn_gamma, bn_beta,
        bn_act=False, stride=1, padding=1, tile_m=128))
    assert float(jnp.max(jnp.abs(outc16 - ref_conv))) < 3e-2

    print("KERNEL_OK")
</pallas_src>

<mosaic_0001>
module attributes {stable_mosaic.version = 11 : i64} {
  func.func @_conv_stats_kernel(%arg0: i32, %arg1: i32, %arg2: memref<128x128xbf16, #tpu.memory_space<vmem>>, %arg3: memref<128x128xbf16, #tpu.memory_space<vmem>>, %arg4: memref<128x128xbf16, #tpu.memory_space<vmem>>, %arg5: memref<8x128xf32, #tpu.memory_space<vmem>>) attributes {dimension_semantics = [#tpu.dimension_semantics<parallel>, #tpu.dimension_semantics<parallel>], iteration_bounds = array<i64: 4, 1>, scalar_prefetch = 0 : i64, scratch_operands = 0 : i64, tpu.core_type = #tpu.core_type<tc>, window_params = [{transform_indices = @transform_0, window_bounds = array<i64: 128, 128>}, {pipeline_mode = #tpu.pipeline_mode<synchronous>, transform_indices = @transform_1, window_bounds = array<i64: 128, 128>}, {transform_indices = @transform_2, window_bounds = array<i64: 128, 128>}, {transform_indices = @transform_3, window_bounds = array<i64: 8, 128>}]} {
    %c0 = arith.constant 0 : index
    %c0_0 = arith.constant 0 : index
    %0 = vector.load %arg3[%c0, %c0_0] : memref<128x128xbf16, #tpu.memory_space<vmem>>, vector<128x128xbf16>
    %c0_1 = arith.constant 0 : index
    %c0_2 = arith.constant 0 : index
    %1 = vector.load %arg2[%c0_1, %c0_2] : memref<128x128xbf16, #tpu.memory_space<vmem>>, vector<128x128xbf16>
    %cst = arith.constant dense<0.000000e+00> : vector<128x128xf32>
    %2 = tpu.matmul %1, %0, %cst {dimension_numbers = #tpu.dot_dimension_numbers<[1], [0], [0], [1], [0, 0, 1, 1], [], []>} : vector<128x128xbf16>, vector<128x128xbf16>, vector<128x128xf32> -> vector<128x128xf32>
    %3 = arith.truncf %2 : vector<128x128xf32> to vector<128x128xbf16>
    %c0_3 = arith.constant 0 : index
    %c0_4 = arith.constant 0 : index
    %4 = vector.load %arg4[%c0_3, %c0_4] : memref<128x128xbf16, #tpu.memory_space<vmem>>, vector<128x128xbf16>
    tpu.vector_store %arg4[%c0_3, %c0_4], %3 {strides = array<i32>} : memref<128x128xbf16, #tpu.memory_space<vmem>>, vector<128x128xbf16>,
    %cst_5 = arith.constant dense<0.000000e+00> : vector<128xf32>
    %5 = vector.multi_reduction <add>, %2, %cst_5 [0] : vector<128x128xf32> to vector<128xf32>
    %6 = vector.shape_cast %5 : vector<128xf32> to vector<1x128xf32>
    %7 = arith.mulf %2, %2 : vector<128x128xf32>
    %cst_6 = arith.constant dense<0.000000e+00> : vector<128xf32>
    %8 = vector.multi_reduction <add>, %7, %cst_6 [0] : vector<128x128xf32> to vector<128xf32>
    %9 = vector.shape_cast %8 : vector<128xf32> to vector<1x128xf32>
    %cst_7 = arith.constant 0.000000e+00 : f32
    %10 = vector.broadcast %cst_7 : f32 to vector<6x128xf32>
    %11 = tpu.concatenate %6, %9, %10 in 0 : vector<1x128xf32>, vector<1x128xf32>, vector<6x128xf32> -> vector<8x128xf32>
    %c0_8 = arith.constant 0 : index
    %c0_9 = arith.constant 0 : index
    %12 = vector.load %arg5[%c0_8, %c0_9] : memref<8x128xf32, #tpu.memory_space<vmem>>, vector<8x128xf32>
    tpu.vector_store %arg5[%c0_8, %c0_9], %11 {strides = array<i32>} : memref<8x128xf32, #tpu.memory_space<vmem>>, vector<8x128xf32>,
    return
  }
  func.func @transform_0(%arg0: i32, %arg1: i32) -> (i32, i32) {
    %c0_i32 = arith.constant 0 : i32
    %c0_i32_0 = arith.constant 0 : i32
    return %arg0, %c0_i32 : i32, i32
  }
  func.func @transform_1(%arg0: i32, %arg1: i32) -> (i32, i32) {
    %c0_i32 = arith.constant 0 : i32
    %c0_i32_0 = arith.constant 0 : i32
    %c0_i32_1 = arith.constant 0 : i32
    return %c0_i32, %c0_i32_0 : i32, i32
  }
  func.func @transform_2(%arg0: i32, %arg1: i32) -> (i32, i32) {
    %c0_i32 = arith.constant 0 : i32
    return %arg0, %arg1 : i32, i32
  }
  func.func @transform_3(%arg0: i32, %arg1: i32) -> (i32, i32) {
    %c0_i32 = arith.constant 0 : i32
    return %arg0, %arg1 : i32, i32
  }
}

</mosaic_0001>

<llo_original>
// kernel: tpu_custom_call.1
$region0: #{tpu_custom_call.1}
  #allocation0 [shape = 'u32[]', space=smem, size = 0x4, offset = 0x4, fixed_abs, tag = 'smem constant byte address 0x4 - core index']
  #allocation1 [shape = 'u32[144,128]{1,0:T(1,128)}', space=vmem, size = 0x12000, scoped, tag = 'internal scratch']
  %s0 = inlined_call_operand.hbm [shape: bf16[512,128], index: 0, kind: input, shape index: {}]
  %s1 = inlined_call_operand.hbm [shape: bf16[128,128], index: 1, kind: input, shape index: {}]
  %s2 = inlined_call_operand.hbm [shape: bf16[512,128], index: 2, kind: output, shape index: {0}]
  %s3 = inlined_call_operand.hbm [shape: f32[32,128], index: 3, kind: output, shape index: {1}]
  %4 = xla_tuple %s2, %s3
  %s5 = sld [smem:[#allocation0]]
  $region57: #{tpu_custom_call.1} parent=0
    _
  %s7 = ssub.s32 1, %s5
  %s8 = scalar_select 0, %s7, %s5
  $region1: #{tpu_custom_call.1} parent=0
    #allocation2 [shape = 'u8[65536]{0}', space=vmem, size = 0x10000, scoped, tag = 'input window, operand 0']
    #allocation3 [shape = 's32[2]{0}', space=sflag, size = 0x8, scoped, tag = 'scoped memory for tpu_custom_call.1']
    #allocation4 [shape = 's32[2]{0}', space=sflag, size = 0x8, scoped, tag = 'scoped memory for tpu_custom_call.1']
    #allocation5 [shape = 'u8[32768]{0}', space=vmem, size = 0x8000, scoped, tag = 'input window, operand 1, single buffered']
    #allocation6 [shape = 's32[1]{0}', space=sflag, size = 0x4, scoped, tag = 'scoped memory for tpu_custom_call.1']
    #allocation7 [shape = 'u8[65536]{0}', space=vmem, size = 0x10000, scoped, tag = 'output window, operand 0']
    #allocation8 [shape = 'u8[8192]{0}', space=vmem, size = 0x2000, scoped, tag = 'output window, operand 1']
    #allocation9 [shape = 's32[2]{0}', space=sflag, size = 0x8, scoped, tag = 'scoped memory for tpu_custom_call.1']
    %9 = vsyncpa [#allocation3], 0
    %s10 = scalar_lea.sflag [#allocation3], 1
    %11 = vsyncpa %s10, 0
    %12 = vsyncpa [#allocation6], 0
    %13 = vsyncpa [#allocation4], 0
    %s14 = scalar_lea.sflag [#allocation4], 1
    %15 = vsyncpa %s14, 0
    %16 = vsyncpa [#allocation9], 0
    %s17 = scalar_lea.sflag [#allocation9], 1
    %18 = vsyncpa %s17, 0
    loop: start=0, step=1, limit=6
    $region2: #{tpu_custom_call.1} parent=1 // loop_pre_header
      _
    $region3: #{tpu_custom_call.1} parent=1 // loop_header
      %s20 = sphi 0, %s24
      %p21 = scmp.ge.s32.totalorder %s20, 6
      %s27 = sphi 0, %s39
      %s28 = sphi 0, %s35
      %s29 = sphi 0, %s27
      %s30 = sphi 0, %s28
      %s31 = sphi 0, %s29
      %s32 = sphi 0, %s30
      %s42 = sphi 0, %s44
      %s45 = sphi 0, %s42
      %s46 = sphi 0, %s45
      %s62 = sphi 0, %s46
      %s66 = sphi 0, %s66
      %s68 = sphi 0, %s66
      %s69 = sphi 0, %s68
      %s83 = sphi 0, %s69
      %s91 = sphi 0, %s93
      %s94 = sphi 0, %s91
      %s95 = sphi 0, %s94
      %s111 = sphi 0, %s95
      %s119 = sphi 0, %s121
      %s122 = sphi 0, %s119
      %s123 = sphi 0, %s122
      %s139 = sphi 0, %s123
    $region4: #{tpu_custom_call.1} parent=1 // loop_header_branch
      %23 = sbr.rel (%p21) target = $region8
    $region5: #{tpu_custom_call.1} parent=1 // loop_body
      %s25 = ssub.s32 %s20, 1
      %s26 = ssub.s32 %s20, 2
      %s33 = sadd.s32 1, %s28
      %p34 = scmp.ge.s32.totalorder %s33, 1
      %s35 = scalar_select %p34, 0, %s33
      %s36 = sadd.s32 1, %s27
      %s37 = scalar_select %p34, %s36, %s27
      %p38 = scmp.ge.s32.totalorder %s37, 4
      %s39 = scalar_select %p38, 0, %s37
      %s40 = ssub.s32 %s27, %s39
      %p41 = scmp.eq.s32.totalorder %s40, 0
      %s43 = sadd.s32 %s42, 1
      %s44 = scalar_select %p41, %s42, %s43
      %p47 = pneg %p41
      %p48 = scmp.eq.s32.totalorder %s20, 3
      %p49 = por %p47, %p48
      %p50 = scmp.ne.s32.totalorder %s42, %s45
      %p51 = scmp.eq.s32.totalorder %s20, 0
      %p52 = por %p50, %p51
      %p53 = scmp.ne.s32.totalorder %s42, %s45
      %p54 = scmp.eq.s32.totalorder %s25, 3
      %p55 = por %p53, %p54
      %p56 = scmp.ne.s32.totalorder %s45, %s46
      %p57 = scmp.eq.s32.totalorder %s25, 0
      %p58 = por %p56, %p57
      %p59 = scmp.ne.s32.totalorder %s45, %s46
      %p60 = scmp.eq.s32.totalorder %s26, 3
      %p61 = por %p59, %p60
      %p63 = scmp.ne.s32.totalorder %s46, %s62
      %p64 = scmp.eq.s32.totalorder %s26, 0
      %p65 = por %p63, %p64
      %s67 = sadd.s32 %s66, 1
      %p70 = scmp.eq.s32.totalorder %s20, 3
      %p71 = scmp.ne.s32.totalorder %s66, %s68
      %p72 = scmp.eq.s32.totalorder %s20, 0
      %p73 = por %p71, %p72
      %p74 = scmp.ne.s32.totalorder %s66, %s68
      %p75 = scmp.eq.s32.totalorder %s25, 3
      %p76 = por %p74, %p75
      %p77 = scmp.ne.s32.totalorder %s68, %s69
      %p78 = scmp.eq.s32.totalorder %s25, 0
      %p79 = por %p77, %p78
      %p80 = scmp.ne.s32.totalorder %s68, %s69
      %p81 = scmp.eq.s32.totalorder %s26, 3
      %p82 = por %p80, %p81
      %p84 = scmp.ne.s32.totalorder %s69, %s83
      %p85 = scmp.eq.s32.totalorder %s26, 0
      %p86 = por %p84, %p85
      %s87 = ssub.s32 %s27, %s39
      %s88 = ssub.s32 %s28, %s35
      %s89 = sor.u32 %s87, %s88
      %p90 = scmp.eq.s32.totalorder %s89, 0
      %s92 = sadd.s32 %s91, 1
      %s93 = scalar_select %p90, %s91, %s92
      %p96 = pneg %p90
      %p97 = scmp.eq.s32.totalorder %s20, 3
      %p98 = por %p96, %p97
      %p99 = scmp.ne.s32.totalorder %s91, %s94
      %p100 = scmp.eq.s32.totalorder %s20, 0
      %p101 = por %p99, %p100
      %p102 = scmp.ne.s32.totalorder %s91, %s94
      %p103 = scmp.eq.s32.totalorder %s25, 3
      %p104 = por %p102, %p103
      %p105 = scmp.ne.s32.totalorder %s94, %s95
      %p106 = scmp.eq.s32.totalorder %s25, 0
      %p107 = por %p105, %p106
      %p108 = scmp.ne.s32.totalorder %s94, %s95
      %p109 = scmp.eq.s32.totalorder %s26, 3
      %p110 = por %p108, %p109
      %p112 = scmp.ne.s32.totalorder %s95, %s111
      %p113 = scmp.eq.s32.totalorder %s26, 0
      %p114 = por %p112, %p113
      %s115 = ssub.s32 %s27, %s39
      %s116 = ssub.s32 %s28, %s35
      %s117 = sor.u32 %s115, %s116
      %p118 = scmp.eq.s32.totalorder %s117, 0
      %s120 = sadd.s32 %s119, 1
      %s121 = scalar_select %p118, %s119, %s120
      %p124 = pneg %p118
      %p125 = scmp.eq.s32.totalorder %s20, 3
      %p126 = por %p124, %p125
      %p127 = scmp.ne.s32.totalorder %s119, %s122
      %p128 = scmp.eq.s32.totalorder %s20, 0
      %p129 = por %p127, %p128
      %p130 = scmp.ne.s32.totalorder %s119, %s122
      %p131 = scmp.eq.s32.totalorder %s25, 3
      %p132 = por %p130, %p131
      %p133 = scmp.ne.s32.totalorder %s122, %s123
      %p134 = scmp.eq.s32.totalorder %s25, 0
      %p135 = por %p133, %p134
      %p136 = scmp.ne.s32.totalorder %s122, %s123
      %p137 = scmp.eq.s32.totalorder %s26, 3
      %p138 = por %p136, %p137
      %p140 = scmp.ne.s32.totalorder %s123, %s139
      %p141 = scmp.eq.s32.totalorder %s26, 0
      %p142 = por %p140, %p141
      %p143 = scmp.le.s32.totalorder 1, %s20
      %p144 = scmp.lt.s32.totalorder %s20, 5
      %p145 = pnand %p143, %p144
      %p146 = pneg %p145
      // Predicated region
      $region9: #{tpu_custom_call.1} parent=5 // pred_check
        _
      $region10: #{tpu_custom_call.1} parent=5 // pred_check_branch
        %148 = sbr.rel (%p145) target = $region12
      $region11: #{tpu_custom_call.1} parent=5 // pred_region
        %s149 = ssub.s32 %s20, 1
        // Predicated region
        $region13: #{tpu_custom_call.1} parent=11 // pred_check
          %p150 = pneg %p79
        $region14: #{tpu_custom_call.1} parent=11 // pred_check_branch
          %152 = sbr.rel (%p150) target = $region16
        $region15: #{tpu_custom_call.1} parent=11 // pred_region
          %s154 = ssub.s32 1024, 1024
          %155 = vsyncadd [#allocation6], %s154
          %s156 = sshll.u32 [#allocation5], 4
          %s157 = int_to_ptr.vmem [resolvable:$true] %s156
          %162 = dma.hbm_to_vmem [thread:$0]  %s1, 1024, %s157, [#allocation6], 64, 64, 4
        $region16: #{tpu_custom_call.1} parent=11 // pred_fallthru
          _
      $region12: #{tpu_custom_call.1} parent=5 // pred_fallthru
        _
      %p163 = scmp.lt.s32.totalorder %s20, 4
      // Predicated region
      $region17: #{tpu_custom_call.1} parent=5 // pred_check
        %p164 = pneg %p163
      $region18: #{tpu_custom_call.1} parent=5 // pred_check_branch
        %166 = sbr.rel (%p164) target = $region20
      $region19: #{tpu_custom_call.1} parent=5 // pred_region
        // Predicated region
        $region21: #{tpu_custom_call.1} parent=19 // pred_check
          %p167 = pneg %p52
        $region22: #{tpu_custom_call.1} parent=19 // pred_check_branch
          %169 = sbr.rel (%p167) target = $region24
        $region23: #{tpu_custom_call.1} parent=19 // pred_region
          %s170 = sand.u32 %s42, 1
          %s171 = scalar_lea.sflag [#allocation3], %s170
          %s172 = sand.u32 %s42, 1
          %s173 = smul.addr %s172, 64
          %s174 = scalar_lea.vmem [#allocation2], %s173
          %s175 = smul.u32 16, %s27
          %s177 = ssub.s32 1024, 1024
          %178 = vsyncadd %s171, %s177
          %s179 = smul.addr %s175, 64
          %s180 = scalar_lea.hbm %s0, %s179
          %s181 = sshll.u32 %s174, 4
          %s182 = int_to_ptr.vmem [resolvable:$true] %s181
          %187 = dma.hbm_to_vmem [thread:$0]  %s180, 1024, %s182, %s171, 64, 64, 4
        $region24: #{tpu_custom_call.1} parent=19 // pred_fallthru
          _
      $region20: #{tpu_custom_call.1} parent=5 // pred_fallthru
        _
      %p188 = scmp.le.s32.totalorder 1, %s20
      %p189 = scmp.lt.s32.totalorder %s20, 5
      %p190 = pnand %p188, %p189
      %p191 = pneg %p190
      // Predicated region
      $region25: #{tpu_custom_call.1} parent=5 // pred_check
        _
      $region26: #{tpu_custom_call.1} parent=5 // pred_check_branch
        %193 = sbr.rel (%p190) target = $region28
      $region27: #{tpu_custom_call.1} parent=5 // pred_region
        %s194 = ssub.s32 %s20, 1
        %s195 = sand.u32 %s45, 1
        %s196 = scalar_lea.sflag [#allocation3], %s195
        %s197 = sand.u32 %s45, 1
        %s198 = smul.addr %s197, 64
        %s199 = scalar_lea.vmem [#allocation2], %s198
        // Predicated region
        $region29: #{tpu_custom_call.1} parent=27 // pred_check
          %p200 = pneg %p58
        $region30: #{tpu_custom_call.1} parent=27 // pred_check_branch
          %202 = sbr.rel (%p200) target = $region32
        $region31: #{tpu_custom_call.1} parent=27 // pred_region
          %203 = dma.done %s196, 1024
        $region32: #{tpu_custom_call.1} parent=27 // pred_fallthru
          _
        // Predicated region
        $region33: #{tpu_custom_call.1} parent=27 // pred_check
          %p204 = pneg %p79
        $region34: #{tpu_custom_call.1} parent=27 // pred_check_branch
          %206 = sbr.rel (%p204) target = $region36
        $region35: #{tpu_custom_call.1} parent=27 // pred_region
          %207 = dma.done [#allocation6], 1024
        $region36: #{tpu_custom_call.1} parent=27 // pred_fallthru
          _
        %s208 = sand.u32 %s45, 1
        %s209 = scalar_lea.sflag [#allocation3], %s208
        %s210 = sand.u32 %s45, 1
        %s211 = smul.addr %s210, 64
        %s212 = scalar_lea.vmem [#allocation2], %s211
        %p213 = pneg %p58
        %p214 = pneg %p55
        %p215 = pneg %p79
        %p216 = pneg %p76
        %p217 = pneg %p107
        %p218 = pneg %p104
        %s219 = sand.u32 %s94, 1
        %s220 = scalar_lea.sflag [#allocation4], %s219
        %s221 = sand.u32 %s94, 1
        %s222 = smul.addr %s221, 64
        %s223 = scalar_lea.vmem [#allocation7], %s222
        %p224 = pneg %p135
        %p225 = pneg %p132
        %s226 = sand.u32 %s122, 1
        %s227 = scalar_lea.sflag [#allocation9], %s226
        %s228 = sand.u32 %s122, 1
        %s229 = smul.addr %s228, 8
        %s230 = scalar_lea.vmem [#allocation8], %s229
        %s231 = smul.u32 16, %s29
        %s232 = smul.u32 16, %s29
        %v234 = vld [vmem:[#allocation5] sm:$0xf]
        %v235 = vld [vmem:[#allocation5 + $0x4] sm:$0xf]
        %v236 = vld [vmem:[#allocation5 + $0x8] sm:$0xf]
        %v237 = vld [vmem:[#allocation5 + $0xc] sm:$0xf]
        %v238 = vld [vmem:[#allocation5 + $0x10] sm:$0xf]
        %v239 = vld [vmem:[#allocation5 + $0x14] sm:$0xf]
        %v240 = vld [vmem:[#allocation5 + $0x18] sm:$0xf]
        %v241 = vld [vmem:[#allocation5 + $0x1c] sm:$0xf]
        %v242 = vld [vmem:[#allocation5 + $0x20] sm:$0xf]
        %v243 = vld [vmem:[#allocation5 + $0x24] sm:$0xf]
        %v244 = vld [vmem:[#allocation5 + $0x28] sm:$0xf]
        %v245 = vld [vmem:[#allocation5 + $0x2c] sm:$0xf]
        %v246 = vld [vmem:[#allocation5 + $0x30] sm:$0xf]
        %v247 = vld [vmem:[#allocation5 + $0x34] sm:$0xf]
        %v248 = vld [vmem:[#allocation5 + $0x38] sm:$0xf]
        %v249 = vld [vmem:[#allocation5 + $0x3c] sm:$0xf]
        %v250 = vld [vmem:[%s199] sm:$0xf]
        %v251 = vld [vmem:[%s199 + $0x4] sm:$0xf]
        %v252 = vld [vmem:[%s199 + $0x8] sm:$0xf]
        %v253 = vld [vmem:[%s199 + $0xc] sm:$0xf]
        %v254 = vld [vmem:[%s199 + $0x10] sm:$0xf]
        %v255 = vld [vmem:[%s199 + $0x14] sm:$0xf]
        %v256 = vld [vmem:[%s199 + $0x18] sm:$0xf]
        %v257 = vld [vmem:[%s199 + $0x1c] sm:$0xf]
        %v258 = vld [vmem:[%s199 + $0x20] sm:$0xf]
        %v259 = vld [vmem:[%s199 + $0x24] sm:$0xf]
        %v260 = vld [vmem:[%s199 + $0x28] sm:$0xf]
        %v261 = vld [vmem:[%s199 + $0x2c] sm:$0xf]
        %v262 = vld [vmem:[%s199 + $0x30] sm:$0xf]
        %v263 = vld [vmem:[%s199 + $0x34] sm:$0xf]
        %v264 = vld [vmem:[%s199 + $0x38] sm:$0xf]
        %v265 = vld [vmem:[%s199 + $0x3c] sm:$0xf]
        %v282 = vunpack.c.l.b16 %v250
        %v283 = vunpack.c.l.b16 %v251
        %v284 = vunpack.c.l.b16 %v252
        %v285 = vunpack.c.l.b16 %v253
        %v286 = vunpack.c.l.b16 %v254
        %v287 = vunpack.c.l.b16 %v255
        %v288 = vunpack.c.l.b16 %v256
        %v289 = vunpack.c.l.b16 %v257
        %v290 = vunpack.c.l.b16 %v258
        %v291 = vunpack.c.l.b16 %v259
        %v292 = vunpack.c.l.b16 %v260
        %v293 = vunpack.c.l.b16 %v261
        %v294 = vunpack.c.l.b16 %v262
        %v295 = vunpack.c.l.b16 %v263
        %v296 = vunpack.c.l.b16 %v264
        %v297 = vunpack.c.l.b16 %v265
        %v298 = vpack.c.b16 %v283, %v282
        %v299 = vpack.c.b16 %v285, %v284
        %v300 = vpack.c.b16 %v287, %v286
        %v301 = vpack.c.b16 %v289, %v288
        %v302 = vpack.c.b16 %v291, %v290
        %v303 = vpack.c.b16 %v293, %v292
        %v304 = vpack.c.b16 %v295, %v294
        %v305 = vpack.c.b16 %v297, %v296
        %v330 = vunpack.c.l.b16 %v234
        %v331 = vunpack.c.l.b16 %v235
        %v332 = vunpack.c.l.b16 %v236
        %v333 = vunpack.c.l.b16 %v237
        %v334 = vunpack.c.l.b16 %v238
        %v335 = vunpack.c.l.b16 %v239
        %v336 = vunpack.c.l.b16 %v240
        %v337 = vunpack.c.l.b16 %v241
        %v338 = vunpack.c.l.b16 %v242
        %v339 = vunpack.c.l.b16 %v243
        %v340 = vunpack.c.l.b16 %v244
        %v341 = vunpack.c.l.b16 %v245
        %v342 = vunpack.c.l.b16 %v246
        %v343 = vunpack.c.l.b16 %v247
        %v344 = vunpack.c.l.b16 %v248
        %v345 = vunpack.c.l.b16 %v249
        %v346 = vpack.c.b16 %v331, %v330
        %v347 = vpack.c.b16 %v333, %v332
        %v348 = vpack.c.b16 %v335, %v334
        %v349 = vpack.c.b16 %v337, %v336
        %v350 = vpack.c.b16 %v339, %v338
        %v351 = vpack.c.b16 %v341, %v340
        %v352 = vpack.c.b16 %v343, %v342
        %v353 = vpack.c.b16 %v345, %v344
        %362 = vmatprep.subr.bf16.mxu0 0
        %363 = vmatpush1.bf16.msra.mxu0 %v346
        %364 = vmatprep.subr.bf16.mxu0 0
        %365 = vmatpush1.bf16.msra.mxu0 %v347
        %366 = vmatprep.subr.bf16.mxu0 0
        %367 = vmatpush1.bf16.msra.mxu0 %v348
        %368 = vmatprep.subr.bf16.mxu0 0
        %369 = vmatpush1.bf16.msra.mxu0 %v349
        %370 = vmatprep.subr.bf16.mxu0 0
        %371 = vmatpush1.bf16.msra.mxu0 %v350
        %372 = vmatprep.subr.bf16.mxu0 0
        %373 = vmatpush1.bf16.msra.mxu0 %v351
        %374 = vmatprep.subr.bf16.mxu0 0
        %375 = vmatpush1.bf16.msra.mxu0 %v352
        %376 = vmatprep.subr.bf16.mxu0 0
        %377 = vmatpush1.bf16.msra.mxu0 %v353
        %378 = vmatprep.subr.bf16.mxu0 0
        %379 = vmatpush1.bf16.msra.mxu0 0
        %380 = vmatprep.subr.bf16.mxu0 0
        %381 = vmatpush1.bf16.msra.mxu0 0
        %382 = vmatprep.subr.bf16.mxu0 0
        %383 = vmatpush1.bf16.msra.mxu0 0
        %384 = vmatprep.subr.bf16.mxu0 0
        %385 = vmatpush1.bf16.msra.mxu0 0
        %386 = vmatprep.subr.bf16.mxu0 0
        %387 = vmatpush1.bf16.msra.mxu0 0
        %388 = vmatprep.subr.bf16.mxu0 0
        %389 = vmatpush1.bf16.msra.mxu0 0
        %390 = vmatprep.subr.bf16.mxu0 0
        %391 = vmatpush1.bf16.msra.mxu0 0
        %392 = vmatprep.subr.bf16.mxu0 0
        %393 = vmatpush1.bf16.msra.mxu0 0
        %394 = vmatprep.mubr.bf16.mxu0 0
        %395 = vmatmul.mubr.bf16.gmra.mrb[0].mxu0 %v298
        %v396 = vpop.f32.mrb[0].mxu0
        %v397 = vadd.f32 0.0, %v396
        %v398 = vpop.f32.mrb[0].mxu0
        %v399 = vpop.f32.mrb[0].mxu0
        %v400 = vadd.f32 0.0, %v399
        %v401 = vpop.f32.mrb[0].mxu0
        %402 = vmatprep.mubr.bf16.mxu0 0
        %403 = vmatmul.mubr.bf16.gmra.mrb[0].mxu0 %v299
        %v404 = vpop.f32.mrb[0].mxu0
        %v405 = vadd.f32 0.0, %v404
        %v406 = vpop.f32.mrb[0].mxu0
        %v407 = vpop.f32.mrb[0].mxu0
        %v408 = vadd.f32 0.0, %v407
        %v409 = vpop.f32.mrb[0].mxu0
        %410 = vmatprep.mubr.bf16.mxu0 0
        %411 = vmatmul.mubr.bf16.gmra.mrb[0].mxu0 %v300
        %v412 = vpop.f32.mrb[0].mxu0
        %v413 = vadd.f32 0.0, %v412
        %v414 = vpop.f32.mrb[0].mxu0
        %v415 = vpop.f32.mrb[0].mxu0
        %v416 = vadd.f32 0.0, %v415
        %v417 = vpop.f32.mrb[0].mxu0
        %418 = vmatprep.mubr.bf16.mxu0 0
        %419 = vmatmul.mubr.bf16.gmra.mrb[0].mxu0 %v301
        %v420 = vpop.f32.mrb[0].mxu0
        %v421 = vadd.f32 0.0, %v420
        %v422 = vpop.f32.mrb[0].mxu0
        %v423 = vpop.f32.mrb[0].mxu0
        %v424 = vadd.f32 0.0, %v423
        %v425 = vpop.f32.mrb[0].mxu0
        %426 = vmatprep.mubr.bf16.mxu0 0
        %427 = vmatmul.mubr.bf16.gmra.mrb[0].mxu0 %v302
        %v428 = vpop.f32.mrb[0].mxu0
        %v429 = vadd.f32 0.0, %v428
        %v430 = vpop.f32.mrb[0].mxu0
        %v431 = vpop.f32.mrb[0].mxu0
        %v432 = vadd.f32 0.0, %v431
        %v433 = vpop.f32.mrb[0].mxu0
        %434 = vmatprep.mubr.bf16.mxu0 0
        %435 = vmatmul.mubr.bf16.gmra.mrb[0].mxu0 %v303
        %v436 = vpop.f32.mrb[0].mxu0
        %v437 = vadd.f32 0.0, %v436
        %v438 = vpop.f32.mrb[0].mxu0
        %v439 = vpop.f32.mrb[0].mxu0
        %v440 = vadd.f32 0.0, %v439
        %v441 = vpop.f32.mrb[0].mxu0
        %442 = vmatprep.mubr.bf16.mxu0 0
        %443 = vmatmul.mubr.bf16.gmra.mrb[0].mxu0 %v304
        %v444 = vpop.f32.mrb[0].mxu0
        %v445 = vadd.f32 0.0, %v444
        %v446 = vpop.f32.mrb[0].mxu0
        %v447 = vpop.f32.mrb[0].mxu0
        %v448 = vadd.f32 0.0, %v447
        %v449 = vpop.f32.mrb[0].mxu0
        %450 = vmatprep.mubr.bf16.mxu0 0
        %451 = vmatmul.mubr.bf16.gmra.mrb[0].mxu0 %v305
        %v452 = vpop.f32.mrb[0].mxu0
        %v453 = vadd.f32 0.0, %v452
        %v454 = vpop.f32.mrb[0].mxu0
        %v455 = vpop.f32.mrb[0].mxu0
        %v456 = vadd.f32 0.0, %v455
        %v457 = vpop.f32.mrb[0].mxu0
        %458 = vdwg.mxu0
        %v459 = vpack.c.bf16 %v400, %v397
        %v460 = vpack.c.bf16 %v408, %v405
        %v461 = vpack.c.bf16 %v416, %v413
        %v462 = vpack.c.bf16 %v424, %v421
        %v463 = vpack.c.bf16 %v432, %v429
        %v464 = vpack.c.bf16 %v440, %v437
        %v465 = vpack.c.bf16 %v448, %v445
        %v466 = vpack.c.bf16 %v456, %v453
        %v475 = vunpack.c.l.b16 %v459
        %v476 = vunpack.c.h.b16 %v459
        %v477 = vunpack.c.l.b16 %v460
        %v478 = vunpack.c.h.b16 %v460
        %v479 = vunpack.c.l.b16 %v461
        %v480 = vunpack.c.h.b16 %v461
        %v481 = vunpack.c.l.b16 %v462
        %v482 = vunpack.c.h.b16 %v462
        %v483 = vunpack.c.l.b16 %v463
        %v484 = vunpack.c.h.b16 %v463
        %v485 = vunpack.c.l.b16 %v464
        %v486 = vunpack.c.h.b16 %v464
        %v487 = vunpack.c.l.b16 %v465
        %v488 = vunpack.c.h.b16 %v465
        %v489 = vunpack.c.l.b16 %v466
        %v490 = vunpack.c.h.b16 %v466
        %v491 = vpack.c.b16 %v475, %v475
        %v492 = vpack.c.b16 %v476, %v476
        %v493 = vpack.c.b16 %v477, %v477
        %v494 = vpack.c.b16 %v478, %v478
        %v495 = vpack.c.b16 %v479, %v479
        %v496 = vpack.c.b16 %v480, %v480
        %v497 = vpack.c.b16 %v481, %v481
        %v498 = vpack.c.b16 %v482, %v482
        %v499 = vpack.c.b16 %v483, %v483
        %v500 = vpack.c.b16 %v484, %v484
        %v501 = vpack.c.b16 %v485, %v485
        %v502 = vpack.c.b16 %v486, %v486
        %v503 = vpack.c.b16 %v487, %v487
        %v504 = vpack.c.b16 %v488, %v488
        %v505 = vpack.c.b16 %v489, %v489
        %v506 = vpack.c.b16 %v490, %v490
        %523 = vst [vmem:[%s223] sm:$0xf] %v491
        %524 = vst [vmem:[%s223 + $0x4] sm:$0xf] %v492
        %525 = vst [vmem:[%s223 + $0x8] sm:$0xf] %v493
        %526 = vst [vmem:[%s223 + $0xc] sm:$0xf] %v494
        %527 = vst [vmem:[%s223 + $0x10] sm:$0xf] %v495
        %528 = vst [vmem:[%s223 + $0x14] sm:$0xf] %v496
        %529 = vst [vmem:[%s223 + $0x18] sm:$0xf] %v497
        %530 = vst [vmem:[%s223 + $0x1c] sm:$0xf] %v498
        %531 = vst [vmem:[%s223 + $0x20] sm:$0xf] %v499
        %532 = vst [vmem:[%s223 + $0x24] sm:$0xf] %v500
        %533 = vst [vmem:[%s223 + $0x28] sm:$0xf] %v501
        %534 = vst [vmem:[%s223 + $0x2c] sm:$0xf] %v502
        %535 = vst [vmem:[%s223 + $0x30] sm:$0xf] %v503
        %536 = vst [vmem:[%s223 + $0x34] sm:$0xf] %v504
        %537 = vst [vmem:[%s223 + $0x38] sm:$0xf] %v505
        %538 = vst [vmem:[%s223 + $0x3c] sm:$0xf] %v506
        %v539 = vadd.f32 %v397, %v400
        %v540 = vadd.f32 %v539, %v405
        %v541 = vadd.f32 %v540, %v408
        %v542 = vadd.f32 %v541, %v413
        %v543 = vadd.f32 %v542, %v416
        %v544 = vadd.f32 %v543, %v421
        %v545 = vadd.f32 %v544, %v424
        %v546 = vadd.f32 %v545, %v429
        %v547 = vadd.f32 %v546, %v432
        %v548 = vadd.f32 %v547, %v437
        %v549 = vadd.f32 %v548, %v440
        %v550 = vadd.f32 %v549, %v445
        %v551 = vadd.f32 %v550, %v448
        %v552 = vadd.f32 %v551, %v453
        %v553 = vadd.f32 %v552, %v456
        %v554 = vrot.slane %v553, 4
        %v555 = vadd.f32 %v553, %v554
        %v556 = vrot.slane %v555, 2
        %v557 = vadd.f32 %v555, %v556
        %v558 = vrot.slane %v557, 1
        %v559 = vadd.f32 %v557, %v558
        %v560 = vmul.f32 %v397, %v397
        %v561 = vmul.f32 %v400, %v400
        %v562 = vmul.f32 %v405, %v405
        %v563 = vmul.f32 %v408, %v408
        %v564 = vmul.f32 %v413, %v413
        %v565 = vmul.f32 %v416, %v416
        %v566 = vmul.f32 %v421, %v421
        %v567 = vmul.f32 %v424, %v424
        %v568 = vmul.f32 %v429, %v429
        %v569 = vmul.f32 %v432, %v432
        %v570 = vmul.f32 %v437, %v437
        %v571 = vmul.f32 %v440, %v440
        %v572 = vmul.f32 %v445, %v445
        %v573 = vmul.f32 %v448, %v448
        %v574 = vmul.f32 %v453, %v453
        %v575 = vmul.f32 %v456, %v456
        %v576 = vadd.f32 %v560, %v561
        %v577 = vadd.f32 %v576, %v562
        %v578 = vadd.f32 %v577, %v563
        %v579 = vadd.f32 %v578, %v564
        %v580 = vadd.f32 %v579, %v565
        %v581 = vadd.f32 %v580, %v566
        %v582 = vadd.f32 %v581, %v567
        %v583 = vadd.f32 %v582, %v568
        %v584 = vadd.f32 %v583, %v569
        %v585 = vadd.f32 %v584, %v570
        %v586 = vadd.f32 %v585, %v571
        %v587 = vadd.f32 %v586, %v572
        %v588 = vadd.f32 %v587, %v573
        %v589 = vadd.f32 %v588, %v574
        %v590 = vadd.f32 %v589, %v575
        %v591 = vrot.slane %v590, 4
        %v592 = vadd.f32 %v590, %v591
        %v593 = vrot.slane %v592, 2
        %v594 = vadd.f32 %v592, %v593
        %v595 = vrot.slane %v594, 1
        %v596 = vadd.f32 %v594, %v595
        %vm597 = vcmask 1040384
        %v598 = vsel %vm597, %v559, %v596
        %vm599 = vcmask 1041408
        %v600 = vsel %vm599, %v598, 0.0
        %601 = vst [vmem:[%s230] sm:$0xff] %v600
        %s602 = sand.u32 %s94, 1
        %s603 = scalar_lea.sflag [#allocation4], %s602
        %s604 = sand.u32 %s94, 1
        %s605 = smul.addr %s604, 64
        %s606 = scalar_lea.vmem [#allocation7], %s605
        %s607 = sand.u32 %s122, 1
        %s608 = scalar_lea.sflag [#allocation9], %s607
        %s609 = sand.u32 %s122, 1
        %s610 = smul.addr %s609, 8
        %s611 = scalar_lea.vmem [#allocation8], %s610
        // Predicated region
        $region37: #{tpu_custom_call.1} parent=27 // pred_check
          %p612 = pneg %p104
        $region38: #{tpu_custom_call.1} parent=27 // pred_check_branch
          %614 = sbr.rel (%p612) target = $region40
        $region39: #{tpu_custom_call.1} parent=27 // pred_region
          %s615 = smul.u32 16, %s29
          %s617 = ssub.s32 1024, 1024
          %618 = vsyncadd %s603, %s617
          %s619 = sadd.s32 %s30, %s615
          %s620 = smul.addr %s619, 64
          %s621 = scalar_lea.hbm %s2, %s620
          %s622 = sshll.u32 %s606, 4
          %s623 = int_to_ptr.vmem [resolvable:$true] %s622
          %628 = dma.vmem_to_hbm [thread:$0]  %s623, 1024, %s621, %s603, 64, 64, 4
        $region40: #{tpu_custom_call.1} parent=27 // pred_fallthru
          _
        // Predicated region
        $region41: #{tpu_custom_call.1} parent=27 // pred_check
          %p629 = pneg %p132
        $region42: #{tpu_custom_call.1} parent=27 // pred_check_branch
          %631 = sbr.rel (%p629) target = $region44
        $region43: #{tpu_custom_call.1} parent=27 // pred_region
          %s633 = ssub.s32 128, 128
          %634 = vsyncadd %s608, %s633
          %s635 = sadd.s32 %s30, %s29
          %s636 = smul.addr %s635, 128
          %s637 = scalar_lea.hbm %s3, %s636
          %s639 = sshll.u32 %s611, 4
          %s640 = int_to_ptr.vmem [resolvable:$true] %s639
          %642 = dma.vmem_to_hbm [thread:$0]  %s640, 128, %s637, %s608
        $region44: #{tpu_custom_call.1} parent=27 // pred_fallthru
          _
      $region28: #{tpu_custom_call.1} parent=5 // pred_fallthru
        _
      %p643 = scmp.le.s32.totalorder 2, %s20
      // Predicated region
      $region45: #{tpu_custom_call.1} parent=5 // pred_check
        %p644 = pneg %p643
      $region46: #{tpu_custom_call.1} parent=5 // pred_check_branch
        %646 = sbr.rel (%p644) target = $region48
      $region47: #{tpu_custom_call.1} parent=5 // pred_region
        %s647 = ssub.s32 %s20, 2
        // Predicated region
        $region49: #{tpu_custom_call.1} parent=47 // pred_check
          %p648 = pneg %p110
        $region50: #{tpu_custom_call.1} parent=47 // pred_check_branch
          %650 = sbr.rel (%p648) target = $region52
        $region51: #{tpu_custom_call.1} parent=47 // pred_region
          %s651 = sand.u32 %s95, 1
          %s652 = scalar_lea.sflag [#allocation4], %s651
          %s653 = sand.u32 %s95, 1
          %s654 = smul.addr %s653, 64
          %s655 = scalar_lea.vmem [#allocation7], %s654
          %656 = dma.done %s652, 1024
        $region52: #{tpu_custom_call.1} parent=47 // pred_fallthru
          _
        // Predicated region
        $region53: #{tpu_custom_call.1} parent=47 // pred_check
          %p657 = pneg %p138
        $region54: #{tpu_custom_call.1} parent=47 // pred_check_branch
          %659 = sbr.rel (%p657) target = $region56
        $region55: #{tpu_custom_call.1} parent=47 // pred_region
          %s660 = sand.u32 %s123, 1
          %s661 = scalar_lea.sflag [#allocation9], %s660
          %s662 = sand.u32 %s123, 1
          %s663 = smul.addr %s662, 8
          %s664 = scalar_lea.vmem [#allocation8], %s663
          %665 = dma.done %s661, 128
        $region56: #{tpu_custom_call.1} parent=47 // pred_fallthru
          _
      $region48: #{tpu_custom_call.1} parent=5 // pred_fallthru
        _
    $region6: #{tpu_custom_call.1} parent=1 // loop_footer
      %s24 = sadd.s32 1, %s20
    $region7: #{tpu_custom_call.1} parent=1 // loop_footer_branch
      %19 = sbr.rel target = $region3
    $region8: #{tpu_custom_call.1} parent=1 // loop_exit
      _
    %666 = vsyncpa [#allocation3], 1
    %s667 = scalar_lea.sflag [#allocation3], 1
    %668 = vsyncpa %s667, 1
    %669 = vsyncpa [#allocation6], 1
    %670 = vsyncpa [#allocation4], 1
    %s671 = scalar_lea.sflag [#allocation4], 1
    %672 = vsyncpa %s671, 1
    %673 = vsyncpa [#allocation9], 1
    %s674 = scalar_lea.sflag [#allocation9], 1
    %675 = vsyncpa %s674, 1

</llo_original>
